<compile_context>
chip_gen: v6e
topology: v6e:2x2x1
jax: 0.10.0
libtpu: 0.0.40
codegen_flags: <defaults>
</compile_context>

<pallas_src>
import functools
import math

import jax
import jax.numpy as jnp
from jax.experimental import pallas as pl
from jax.experimental.pallas import tpu as pltpu


def _smoothing_loss_kernel(x_ref, out_ref, *, theta: float, seq_len: int):
    """One block of bn*seq_len flattened (batch-major, time-minor) logit rows.

    x_ref:   (R, C)     logit rows, R = bn * seq_len (whole sequences only)
    out_ref: (1, 1, C)  per-program partial sums (reduced over rows only)
    """
    x = x_ref[...].astype(jnp.float32)                     # (R, C)
    rows = x_ref.shape[0]

    # Row-wise log_softmax over the class (lane) axis.
    m = jnp.max(x, axis=-1, keepdims=True)                 # (R, 1)
    z = x - m
    lse = jnp.log(jnp.sum(jnp.exp(z), axis=-1, keepdims=True))
    ls = z - lse                                           # (R, C)

    # prev[r] = ls[r-1]: one sublane rotate (XLU slot) instead of two
    # sublane-misaligned (T-1, C) slice copies.
    prev = pltpu.roll(ls, shift=1, axis=0)
    d = ls - prev                                          # ls[t] - ls[t-1]

    # Sequence-boundary masking folded into the clamp threshold: rows whose
    # "previous" row belongs to a different sequence (time step 0 of each
    # sequence, incl. the circular-wrap row 0) get theta = 0, and d*d >= 0 so
    # min(d*d, 0) == 0.  Costs O(R) (one (R,1) iota + where), not O(R*C).
    row = jax.lax.broadcasted_iota(jnp.int32, (rows, 1), 0)
    theta_row = jnp.where(row % seq_len == 0, 0.0, theta).astype(jnp.float32)
    sq = jnp.minimum(d * d, theta_row)                     # (R, C)

    # Reduce over rows only (cross-vreg VPU adds + tiny sublane reduce); the
    # cross-program / cross-lane reduction happens outside the kernel.
    out_ref[0] = jnp.sum(sq, axis=0, keepdims=True)        # (1, C)


def _tpu_vmem_budget():
    """Returns (target input-block bytes, physical VMEM bytes or None)."""
    cap = None
    try:
        cap = getattr(pltpu.get_tpu_info(), "vmem_capacity_bytes", None)
    except Exception:
        cap = None
    if cap is not None and cap >= (96 << 20):
        return 8 << 20, cap          # v5e / v6e: 128 MiB VMEM -> bigger blocks
    return 4 << 20, cap              # v7x (64 MiB) / unknown: conservative


def smoothing_loss(logits: jax.Array, theta: float = 16.0,
                   *, target_block_bytes: int | None = None) -> jax.Array:
    """logits: (N, T, C) float array. Returns scalar f32 loss."""
    N, T, C = logits.shape
    assert T >= 2, "need at least 2 time steps"
    count = N * (T - 1) * C

    auto_target, vmem_cap = _tpu_vmem_budget()
    if target_block_bytes is None:
        target_block_bytes = auto_target

    itemsize = jnp.dtype(logits.dtype).itemsize
    # Sublane packing of the input dtype: 8 rows for 4-byte, 16 for 2-byte,
    # 32 for 1-byte elements.  bn*T must be a multiple of `sub` (or full dim).
    sub = 8 * max(1, 4 // itemsize)
    q = sub // math.gcd(T, sub)                  # smallest bn with (bn*T) % sub == 0

    seq_bytes = T * C * itemsize
    bn_target = max(1, target_block_bytes // seq_bytes)

    bn = None
    pad_n = 0
    # Preferred path: bn divides N exactly (no padding copy) and is q-aligned.
    max_bn = min(N, max(2 * bn_target, 64), 65536)
    cands = [d for d in range(1, max_bn + 1) if N % d == 0 and d % q == 0]
    if cands:
        # Keep >= 2 grid steps when possible (megacore split + pipeline overlap).
        usable = [d for d in cands if d < N] or cands
        fit = [d for d in usable if d <= bn_target]
        b = max(fit) if fit else min(usable)
        if b * seq_bytes <= 4 * target_block_bytes:
            bn = b
    if bn is None and N * seq_bytes <= 4 * target_block_bytes:
        bn = N                                   # one full-array block (always legal)
    if bn is None:
        # Rare last resort (e.g. awkward T alignment + large N*C): zero-pad the
        # batch.  Padded rows have constant log_softmax -> zero difference ->
        # zero contribution; the mean divides by the true (unpadded) count.
        bn = max(q, (bn_target // q) * q)
        pad_n = (-N) % bn

    n_eff = N + pad_n
    if pad_n:
        logits = jnp.concatenate(
            [logits, jnp.zeros((pad_n, T, C), dtype=logits.dtype)], axis=0)

    block_rows = bn * T
    grid = n_eff // bn
    x2d = logits.reshape(n_eff * T, C)           # contiguous, free reshape

    # VMEM budget: 2x double-buffered input block + ~4 (R, C) f32 intermediates
    # (x, ls, rolled prev, d/sq) that the roll keeps materialized, + margin.
    in_block_bytes = block_rows * C * itemsize
    f32_block_bytes = block_rows * C * 4
    vmem_need = 2 * in_block_bytes + 4 * f32_block_bytes + (2 << 20)
    phys = vmem_cap if vmem_cap else (64 << 20)
    vmem_limit = int(min(max(vmem_need, 32 << 20), max(phys - (8 << 20), 32 << 20)))

    kernel = functools.partial(_smoothing_loss_kernel,
                               theta=float(theta), seq_len=T)

    partials = pl.pallas_call(
        kernel,
        out_shape=jax.ShapeDtypeStruct((grid, 1, C), jnp.float32),
        grid_spec=pltpu.PrefetchScalarGridSpec(
            num_scalar_prefetch=0,
            grid=(grid,),
            in_specs=[
                # NOTE: if an xprof trace still shows exposed DMA per step, try
                # pipeline_mode=pl.Buffered(3) here (VMEM budget leaves room).
                pl.BlockSpec((block_rows, C), lambda i: (i, 0)),
            ],
            out_specs=pl.BlockSpec((1, 1, C), lambda i: (i, 0, 0)),
        ),
        compiler_params=pltpu.CompilerParams(
            dimension_semantics=("parallel",),
            vmem_limit_bytes=vmem_limit,
        ),
    )(x2d)

    return (jnp.sum(partials) / count).astype(jnp.float32)


def _reference(logits, theta=16.0):
    ls = jax.nn.log_softmax(logits.astype(jnp.float32), axis=-1)
    d = ls[:, 1:, :] - ls[:, :-1, :]
    return jnp.mean(jnp.clip(d * d, 0.0, theta))


if __name__ == "__main__":
    key = jax.random.PRNGKey(0)
    N, T, C = 2, 8, 32
    logits = jax.random.normal(key, (N, T, C), dtype=jnp.float32) * 4.0

    loss = jax.jit(smoothing_loss)(logits)
    jax.block_until_ready(loss)

    ref = _reference(logits)
    assert jnp.allclose(loss, ref, atol=1e-4, rtol=1e-4), (loss, ref)

    print("KERNEL_OK")
</pallas_src>

<mosaic_0001>
module attributes {stable_mosaic.version = 11 : i64} {
  func.func @_smoothing_loss_kernel(%arg0: i32, %arg1: memref<8x32xf32, #tpu.memory_space<vmem>>, %arg2: memref<1x1x32xf32, #tpu.memory_space<vmem>>) attributes {dimension_semantics = [#tpu.dimension_semantics<parallel>], iteration_bounds = array<i64: 2>, scalar_prefetch = 0 : i64, scratch_operands = 0 : i64, tpu.core_type = #tpu.core_type<tc>, window_params = [{transform_indices = @transform_0, window_bounds = array<i64: 8, 32>}, {transform_indices = @transform_1, window_bounds = array<i64: 1, 1, 32>}]} {
    %c0 = arith.constant 0 : index
    %c0_0 = arith.constant 0 : index
    %0 = vector.load %arg1[%c0, %c0_0] : memref<8x32xf32, #tpu.memory_space<vmem>>, vector<8x32xf32>
    %cst = arith.constant dense<0xFF800000> : vector<8xf32>
    %1 = vector.multi_reduction <maximumf>, %0, %cst [1] : vector<8x32xf32> to vector<8xf32>
    %2 = vector.shape_cast %1 : vector<8xf32> to vector<8x1xf32>
    %3 = vector.broadcast %2 : vector<8x1xf32> to vector<8x32xf32>
    %4 = arith.subf %0, %3 : vector<8x32xf32>
    %5 = math.exp %4 : vector<8x32xf32>
    %cst_1 = arith.constant dense<0.000000e+00> : vector<8xf32>
    %6 = vector.multi_reduction <add>, %5, %cst_1 [1] : vector<8x32xf32> to vector<8xf32>
    %7 = vector.shape_cast %6 : vector<8xf32> to vector<8x1xf32>
    %8 = math.log %7 : vector<8x1xf32>
    %9 = vector.broadcast %8 : vector<8x1xf32> to vector<8x32xf32>
    %10 = arith.subf %4, %9 : vector<8x32xf32>
    %c1_i32 = arith.constant 1 : i32
    %11 = tpu.dynamic_rotate %10 by %c1_i32 dim 0 : vector<8x32xf32>, i32 -> vector<8x32xf32>
    %12 = arith.subf %10, %11 : vector<8x32xf32>
    %13 = tpu.iota {dimensions = array<i32: 0>} : vector<8x1xi32>
    %c8_i32 = arith.constant 8 : i32
    %c0_i32 = arith.constant 0 : i32
    %14 = arith.cmpi eq, %c8_i32, %c0_i32 : i32
    %c1_i32_2 = arith.constant 1 : i32
    %15 = arith.select %14, %c1_i32_2, %c8_i32 : i32
    %16 = vector.broadcast %15 : i32 to vector<8x1xi32>
    %17 = arith.remsi %13, %16 : vector<8x1xi32>
    %c0_i32_3 = arith.constant 0 : i32
    %18 = vector.broadcast %c0_i32_3 : i32 to vector<8x1xi32>
    %19 = arith.cmpi ne, %17, %18 : vector<8x1xi32>
    %c0_i32_4 = arith.constant 0 : i32
    %20 = vector.broadcast %c0_i32_4 : i32 to vector<8x1xi32>
    %21 = arith.cmpi slt, %17, %20 : vector<8x1xi32>
    %c0_i32_5 = arith.constant 0 : i32
    %22 = arith.cmpi slt, %15, %c0_i32_5 : i32
    %23 = vector.broadcast %22 : i1 to vector<8x1xi1>
    %24 = vector.broadcast %23 : vector<8x1xi1> to vector<8x1xi1>
    %25 = arith.xori %21, %24 : vector<8x1xi1>
    %26 = arith.andi %25, %19 : vector<8x1xi1>
    %27 = vector.broadcast %15 : i32 to vector<8x1xi32>
    %28 = arith.addi %17, %27 : vector<8x1xi32>
    %29 = arith.select %26, %28, %17 : vector<8x1xi1>, vector<8x1xi32>
    %c0_i32_6 = arith.constant 0 : i32
    %30 = vector.broadcast %c0_i32_6 : i32 to vector<8x1xi32>
    %31 = arith.cmpi eq, %29, %30 : vector<8x1xi32>
    %cst_7 = arith.constant 0.000000e+00 : f32
    %cst_8 = arith.constant 1.600000e+01 : f32
    %32 = vector.broadcast %cst_7 : f32 to vector<8x1xf32>
    %33 = vector.broadcast %cst_8 : f32 to vector<8x1xf32>
    %34 = arith.select %31, %32, %33 : vector<8x1xi1>, vector<8x1xf32>
    %35 = arith.mulf %12, %12 : vector<8x32xf32>
    %36 = vector.broadcast %34 : vector<8x1xf32> to vector<8x32xf32>
    %37 = arith.minimumf %35, %36 : vector<8x32xf32>
    %cst_9 = arith.constant dense<0.000000e+00> : vector<32xf32>
    %38 = vector.multi_reduction <add>, %37, %cst_9 [0] : vector<8x32xf32> to vector<32xf32>
    %39 = vector.shape_cast %38 : vector<32xf32> to vector<1x32xf32>
    %c0_10 = arith.constant 0 : index
    %c0_11 = arith.constant 0 : index
    %c0_12 = arith.constant 0 : index
    %40 = vector.load %arg2[%c0_10, %c0_11, %c0_12] : memref<1x1x32xf32, #tpu.memory_space<vmem>>, vector<1x1x32xf32>
    %41 = vector.shape_cast %40 : vector<1x1x32xf32> to vector<1x32xf32>
    %42 = vector.shape_cast %39 : vector<1x32xf32> to vector<1x1x32xf32>
    tpu.vector_store %arg2[%c0_10, %c0_11, %c0_12], %42 {strides = array<i32>} : memref<1x1x32xf32, #tpu.memory_space<vmem>>, vector<1x1x32xf32>,
    return
  }
  func.func @transform_0(%arg0: i32) -> (i32, i32) {
    %c0_i32 = arith.constant 0 : i32
    %c0_i32_0 = arith.constant 0 : i32
    return %arg0, %c0_i32 : i32, i32
  }
  func.func @transform_1(%arg0: i32) -> (i32, i32, i32) {
    %c0_i32 = arith.constant 0 : i32
    %c0_i32_0 = arith.constant 0 : i32
    %c0_i32_1 = arith.constant 0 : i32
    return %arg0, %c0_i32, %c0_i32_0 : i32, i32, i32
  }
}

</mosaic_0001>

<llo_original>
// kernel: smoothing_loss.1
$region0: #{smoothing_loss.1}
  #allocation0 [shape = 'u32[]', space=smem, size = 0x4, offset = 0x4, fixed_abs, tag = 'smem constant byte address 0x4 - core index']
  #allocation1 [shape = 'u32[144,128]{1,0:T(1,128)}', space=vmem, size = 0x12000, scoped, tag = 'internal scratch']
  %s0 = inlined_call_operand.hbm [shape: f32[16,32], index: 0, kind: input, shape index: {}]
  %s1 = inlined_call_operand.vmem [shape: f32[2,1,32], index: 1, kind: output, shape index: {}]
  %s2 = sld [smem:[#allocation0]]
  $region41: #{smoothing_loss.1} parent=0
    _
  %s4 = ssub.s32 1, %s2
  %s5 = scalar_select 0, %s4, %s2
  $region1: #{smoothing_loss.1} parent=0
    #allocation2 [shape = 'u8[8192]{0}', space=vmem, size = 0x2000, scoped, tag = 'input window, operand 0']
    #allocation3 [shape = 's32[2]{0}', space=sflag, size = 0x8, scoped, tag = 'scoped memory for smoothing_loss.1']
    %6 = vsyncpa [#allocation3], 0
    %s7 = scalar_lea.sflag [#allocation3], 1
    %8 = vsyncpa %s7, 0
    loop: start=0, step=1, limit=4
    $region2: #{smoothing_loss.1} parent=1 // loop_pre_header
      _
    $region3: #{smoothing_loss.1} parent=1 // loop_header
      %s10 = sphi 0, %s14
      %p11 = scmp.ge.s32.totalorder %s10, 4
      %s20 = sphi 0, %s22
      %s23 = sphi 0, %s20
      %s24 = sphi 0, %s23
      %s40 = sphi 0, %s24
      %s46 = sphi 0, %s48
      %s49 = sphi 0, %s46
      %s50 = sphi 0, %s49
      %s66 = sphi 0, %s50
    $region4: #{smoothing_loss.1} parent=1 // loop_header_branch
      %13 = sbr.rel (%p11) target = $region8
    $region5: #{smoothing_loss.1} parent=1 // loop_body
      %s15 = ssub.s32 %s10, 1
      %s16 = ssub.s32 %s10, 2
      %s17 = sadd.s32 %s10, 1
      %s18 = ssub.s32 %s10, %s17
      %p19 = scmp.eq.s32.totalorder %s18, 0
      %s21 = sadd.s32 %s20, 1
      %s22 = scalar_select %p19, %s20, %s21
      %p25 = pneg %p19
      %p26 = scmp.eq.s32.totalorder %s10, 1
      %p27 = por %p25, %p26
      %p28 = scmp.ne.s32.totalorder %s20, %s23
      %p29 = scmp.eq.s32.totalorder %s10, 0
      %p30 = por %p28, %p29
      %p31 = scmp.ne.s32.totalorder %s20, %s23
      %p32 = scmp.eq.s32.totalorder %s15, 1
      %p33 = por %p31, %p32
      %p34 = scmp.ne.s32.totalorder %s23, %s24
      %p35 = scmp.eq.s32.totalorder %s15, 0
      %p36 = por %p34, %p35
      %p37 = scmp.ne.s32.totalorder %s23, %s24
      %p38 = scmp.eq.s32.totalorder %s16, 1
      %p39 = por %p37, %p38
      %p41 = scmp.ne.s32.totalorder %s24, %s40
      %p42 = scmp.eq.s32.totalorder %s16, 0
      %p43 = por %p41, %p42
      %s44 = ssub.s32 %s10, %s17
      %p45 = scmp.eq.s32.totalorder %s44, 0
      %s47 = sadd.s32 %s46, 1
      %s48 = scalar_select %p45, %s46, %s47
      %p51 = pneg %p45
      %p52 = scmp.eq.s32.totalorder %s10, 1
      %p53 = por %p51, %p52
      %p54 = scmp.ne.s32.totalorder %s46, %s49
      %p55 = scmp.eq.s32.totalorder %s10, 0
      %p56 = por %p54, %p55
      %p57 = scmp.ne.s32.totalorder %s46, %s49
      %p58 = scmp.eq.s32.totalorder %s15, 1
      %p59 = por %p57, %p58
      %p60 = scmp.ne.s32.totalorder %s49, %s50
      %p61 = scmp.eq.s32.totalorder %s15, 0
      %p62 = por %p60, %p61
      %p63 = scmp.ne.s32.totalorder %s49, %s50
      %p64 = scmp.eq.s32.totalorder %s16, 1
      %p65 = por %p63, %p64
      %p67 = scmp.ne.s32.totalorder %s50, %s66
      %p68 = scmp.eq.s32.totalorder %s16, 0
      %p69 = por %p67, %p68
      %p70 = scmp.le.s32.totalorder 1, %s10
      %p71 = scmp.lt.s32.totalorder %s10, 3
      %p72 = pnand %p70, %p71
      %p73 = pneg %p72
      // Predicated region
      $region9: #{smoothing_loss.1} parent=5 // pred_check
        _
      $region10: #{smoothing_loss.1} parent=5 // pred_check_branch
        %75 = sbr.rel (%p72) target = $region12
      $region11: #{smoothing_loss.1} parent=5 // pred_region
        %s76 = ssub.s32 %s10, 1
      $region12: #{smoothing_loss.1} parent=5 // pred_fallthru
        _
      %p77 = scmp.lt.s32.totalorder %s10, 2
      // Predicated region
      $region13: #{smoothing_loss.1} parent=5 // pred_check
        %p78 = pneg %p77
      $region14: #{smoothing_loss.1} parent=5 // pred_check_branch
        %80 = sbr.rel (%p78) target = $region16
      $region15: #{smoothing_loss.1} parent=5 // pred_region
        // Predicated region
        $region17: #{smoothing_loss.1} parent=15 // pred_check
          %p81 = pneg %p30
        $region18: #{smoothing_loss.1} parent=15 // pred_check_branch
          %83 = sbr.rel (%p81) target = $region20
        $region19: #{smoothing_loss.1} parent=15 // pred_region
          %s84 = sand.u32 %s20, 1
          %s85 = scalar_lea.sflag [#allocation3], %s84
          %s86 = sand.u32 %s20, 1
          %s87 = smul.addr %s86, 8
          %s88 = scalar_lea.vmem [#allocation2], %s87
          %s90 = ssub.s32 128, 128
          %91 = vsyncadd %s85, %s90
          %s92 = smul.addr %s10, 128
          %s93 = scalar_lea.hbm %s0, %s92
          %s95 = sshll.u32 %s88, 4
          %s96 = int_to_ptr.vmem [resolvable:$true] %s95
          %98 = dma.hbm_to_vmem [thread:$0]  %s93, 128, %s96, %s85
        $region20: #{smoothing_loss.1} parent=15 // pred_fallthru
          _
      $region16: #{smoothing_loss.1} parent=5 // pred_fallthru
        _
      %p99 = scmp.le.s32.totalorder 1, %s10
      %p100 = scmp.lt.s32.totalorder %s10, 3
      %p101 = pnand %p99, %p100
      %p102 = pneg %p101
      // Predicated region
      $region21: #{smoothing_loss.1} parent=5 // pred_check
        _
      $region22: #{smoothing_loss.1} parent=5 // pred_check_branch
        %104 = sbr.rel (%p101) target = $region24
      $region23: #{smoothing_loss.1} parent=5 // pred_region
        %s105 = ssub.s32 %s10, 1
        %s106 = sand.u32 %s23, 1
        %s107 = scalar_lea.sflag [#allocation3], %s106
        %s108 = sand.u32 %s23, 1
        %s109 = smul.addr %s108, 8
        %s110 = scalar_lea.vmem [#allocation2], %s109
        // Predicated region
        $region25: #{smoothing_loss.1} parent=23 // pred_check
          %p111 = pneg %p36
        $region26: #{smoothing_loss.1} parent=23 // pred_check_branch
          %113 = sbr.rel (%p111) target = $region28
        $region27: #{smoothing_loss.1} parent=23 // pred_region
          %114 = dma.done %s107, 128
        $region28: #{smoothing_loss.1} parent=23 // pred_fallthru
          _
        %s115 = sand.u32 %s23, 1
        %s116 = scalar_lea.sflag [#allocation3], %s115
        %s117 = sand.u32 %s23, 1
        %s118 = smul.addr %s117, 8
        %s119 = scalar_lea.vmem [#allocation2], %s118
        %p120 = pneg %p36
        %p121 = pneg %p33
        %p122 = pneg %p62
        %p123 = pneg %p59
        %p124 = scmp.lt.s32.totalorder %s15, 1
        %s125 = scalar_select %p124, %s15, 1
        %s126 = scalar_lea.vmem %s1, %s125
        %p127 = scmp.lt.s32.totalorder %s15, 1
        %s128 = scalar_select %p127, %s15, 1
        %s129 = scalar_lea.vmem %s1, %s128
        %v130 = vld [vmem:[%s110] sm:$0xff]
        %vm131 = vcmask 261120
        %v132 = vsel %vm131, %v130, -inf
        %133 = vmax.xlane.f32.xlu0 %v132
        %v134 = vpop.xlane.xlu0 %133
        %v135 = vsub.f32 %v130, %v134
        %v136 = vmul.f32 %v135, 1.442695
        %v137 = vpow.pop %v136
        %v138 = vsel %vm131, %v137, 0.0
        %139 = vadd.xlane.f32.xlu0 %v138
        %v140 = vpop.xlane.xlu0 %139
        %v141 = vlog2.pop %v140
        %v142 = vmul.f32 %v141, 0.6931472
        %v143 = vsub.f32 %v135, %v142
        %v144 = vrot.slane %v143, 7
        %v145 = vsub.f32 %v143, %v144
        %v146 = vlaneseq
        %v147 = vshrl.u32 %v146, 7
        %vm148 = vcmp.lt.s32.totalorder %v147, 0
        %v149 = vsub.s32 0, %v147
        %v150 = vsel %vm148, %v149, %v147
        %v151 = vshrl.u32 %v150, 3
        %v152 = vand.u32 %v150, 7
        %v153 = vsub.s32 0, %v152
        %v154 = vsel %vm148, %v153, %v152
        %vm155 = vcmp.ne.s32.totalorder %v154, 0
        %vm156 = vcmp.lt.s32.totalorder %v154, 0
        %vm157 = vmand %vm156, %vm155
        %v158 = vadd.s32 %v154, 8
        %v159 = vsel %vm157, %v158, %v154
        %vm160 = vcmp.eq.s32.totalorder %v159, 0
        %v161 = vsel %vm160, 0.0, 16.0
        %v162 = vmul.f32 %v145, %v145
        %v163 = vmin.f32 %v162, %v161
        %v164 = vsel %vm131, %v163, 0.0
        %v165 = vrot.slane %v164, 4
        %v166 = vadd.f32 %v164, %v165
        %v167 = vrot.slane %v166, 2
        %v168 = vadd.f32 %v166, %v167
        %v169 = vrot.slane %v168, 1
        %v170 = vadd.f32 %v168, %v169
        %vm171 = vcmask 253952
        %172 = vst.msk [vmem:[%s129] sm:$0x1] %vm171, %v170
        %p173 = scmp.lt.s32.totalorder %s15, 1
        %s174 = scalar_select %p173, %s15, 1
        %s175 = scalar_lea.vmem %s1, %s174
        // Predicated region
        $region29: #{smoothing_loss.1} parent=23 // pred_check
          %p176 = pneg %p59
        $region30: #{smoothing_loss.1} parent=23 // pred_check_branch
          %178 = sbr.rel (%p176) target = $region32
        $region31: #{smoothing_loss.1} parent=23 // pred_region
          _
        $region32: #{smoothing_loss.1} parent=23 // pred_fallthru
          _
      $region24: #{smoothing_loss.1} parent=5 // pred_fallthru
        _
      %p179 = scmp.le.s32.totalorder 2, %s10
      // Predicated region
      $region33: #{smoothing_loss.1} parent=5 // pred_check
        %p180 = pneg %p179
      $region34: #{smoothing_loss.1} parent=5 // pred_check_branch
        %182 = sbr.rel (%p180) target = $region36
      $region35: #{smoothing_loss.1} parent=5 // pred_region
        %s183 = ssub.s32 %s10, 2
        // Predicated region
        $region37: #{smoothing_loss.1} parent=35 // pred_check
          %p184 = pneg %p65
        $region38: #{smoothing_loss.1} parent=35 // pred_check_branch
          %186 = sbr.rel (%p184) target = $region40
        $region39: #{smoothing_loss.1} parent=35 // pred_region
          %p187 = scmp.lt.s32.totalorder %s16, 1
          %s188 = scalar_select %p187, %s16, 1
          %s189 = scalar_lea.vmem %s1, %s188
        $region40: #{smoothing_loss.1} parent=35 // pred_fallthru
          _
      $region36: #{smoothing_loss.1} parent=5 // pred_fallthru
        _
    $region6: #{smoothing_loss.1} parent=1 // loop_footer
      %s14 = sadd.s32 1, %s10
    $region7: #{smoothing_loss.1} parent=1 // loop_footer_branch
      %9 = sbr.rel target = $region3
    $region8: #{smoothing_loss.1} parent=1 // loop_exit
      _
    %190 = vsyncpa [#allocation3], 1
    %s191 = scalar_lea.sflag [#allocation3], 1
    %192 = vsyncpa %s191, 1

</llo_original>
